<compile_context>
chip_gen: v7x
topology: tpu7x:2x2x1
jax: 0.10.0
libtpu: 0.0.40
codegen_flags: <defaults>
</compile_context>

<pallas_src>
import jax
import jax.numpy as jnp
from jax.experimental import pallas as pl
from jax.experimental.pallas import tpu as pltpu

LANES = 128
MIN_GRID_STEPS = 8          # keep the DMA pipeline busy / both v7x TCs fed
_MIB = 1024 * 1024


def _round_up(x: int, m: int) -> int:
    return ((x + m - 1) // m) * m


def _select_tiling_bytes():
    """Generation-aware (block_bytes, vmem_limit_bytes).

    v5e / v6e (128 MiB physical VMEM): 4 MiB blocks; 2 in + 2 out pipeline
    buffers = 16 MiB, comfortably under an explicit 32 MiB scoped-VMEM limit.
    v7x (64 MiB physical VMEM, 3.2 TB/s HBM): 6 MiB blocks to amortize the
    ~0.35 us per-grid-step overhead at the higher bandwidth; 40 MiB limit.
    """
    block_bytes, vmem_limit = 4 * _MIB, 32 * _MIB
    try:
        vmem_cap = int(getattr(pltpu.get_tpu_info(), "vmem_capacity_bytes", 0) or 0)
        if 0 < vmem_cap <= 64 * _MIB:        # v7x-class TensorCore
            block_bytes, vmem_limit = 6 * _MIB, 40 * _MIB
    except Exception:
        pass                                  # safe fallback works on all gens
    return block_bytes, vmem_limit


def _make_kernel(mean: float, std: float):
    def kernel(x_ref, o_ref):
        x = x_ref[...].astype(jnp.float32)
        o_ref[...] = ((x - mean) / std).astype(o_ref.dtype)
    return kernel


def _normalize_slab(x2d: jax.Array, mean: float, std: float,
                    *, donate_input: bool = False) -> jax.Array:
    """Run the streaming kernel on a lane-dense (rows, 128) slab."""
    rows = x2d.shape[0]
    dtype = x2d.dtype
    itemsize = jnp.dtype(dtype).itemsize

    block_bytes, vmem_limit = _select_tiling_bytes()

    # dtype-aware sublane multiple: 8 (f32) / 16 (bf16) / 32 (int8) so stores
    # stay full, unmasked vst.
    sublane_mult = max(8, 32 // itemsize)
    target_rows = max(
        sublane_mult,
        (block_bytes // (LANES * itemsize)) // sublane_mult * sublane_mult,
    )

    # Cap the tile so the grid has at least MIN_GRID_STEPS steps: restores
    # in/out DMA overlap for mid-sized tensors and gives the v7x megacore
    # something to split.
    min_step_rows = _round_up(pl.cdiv(rows, MIN_GRID_STEPS), sublane_mult)
    row_tile = max(sublane_mult, min(target_rows, min_step_rows))

    grid = (pl.cdiv(rows, row_tile),)

    return pl.pallas_call(
        _make_kernel(mean, std),
        out_shape=jax.ShapeDtypeStruct((rows, LANES), dtype),
        grid=grid,
        in_specs=[pl.BlockSpec((row_tile, LANES), lambda i: (i, 0))],
        out_specs=pl.BlockSpec((row_tile, LANES), lambda i: (i, 0)),
        input_output_aliases=({0: 0} if donate_input else {}),
        compiler_params=pltpu.CompilerParams(
            dimension_semantics=("parallel",),
            vmem_limit_bytes=vmem_limit,
        ),
    )(x2d)


def normalize0d(x: jax.Array, mean, std, *, donate_input: bool = False) -> jax.Array:
    """(x - mean) / std, elementwise, computed in a Pallas TPU kernel.

    Floating-point dtypes only (compute in f32, cast back to x.dtype).
    """
    orig_shape = x.shape
    dtype = x.dtype
    n = x.size

    mean = float(mean)
    std = float(std)

    if n == 0:
        return x

    flat = jnp.ravel(x)

    if n < LANES:
        # Tiny input: a kernel launch is all overhead; plain JAX is exact.
        out = ((flat.astype(jnp.float32) - mean) / std).astype(dtype)
        return out.reshape(orig_shape)

    if n % LANES == 0:
        # Common case: zero-copy lane-dense slab.
        out2d = _normalize_slab(flat.reshape(n // LANES, LANES), mean, std,
                                donate_input=donate_input)
        return out2d.reshape(orig_shape)

    # Ragged size: pad to the next lane multiple, run the same kernel, slice.
    # TODO(synk): fold the <128-element remainder into the kernel via a masked
    # tail block to avoid the pad/slice copies for ragged sizes.
    n_pad = _round_up(n, LANES)
    padded = jnp.pad(flat, (0, n_pad - n))
    out2d = _normalize_slab(padded.reshape(n_pad // LANES, LANES), mean, std)
    return out2d.reshape(-1)[:n].reshape(orig_shape)


if __name__ == "__main__":
    key = jax.random.PRNGKey(0)
    k0, k1 = jax.random.split(key)

    mean = 1.5
    std = 3.0

    # NCHW input consistent with an image-normalization transform:
    # batch=2, channels=4, spatial=16x16.
    x = jax.random.normal(k0, (2, 4, 16, 16), dtype=jnp.float32) * 3.0 + 1.5
    out = jax.block_until_ready(normalize0d(x, mean, std))
    ref = (x - mean) / std
    assert out.shape == x.shape
    assert out.dtype == x.dtype
    assert jnp.allclose(out, ref, atol=1e-6, rtol=1e-6), "mismatch vs reference"

    # Ragged size (not a multiple of 128) exercises the padded path.
    x2 = jax.random.normal(k1, (3, 5, 11), dtype=jnp.float32) * 2.0 - 0.7
    out2 = jax.block_until_ready(normalize0d(x2, mean, std))
    ref2 = (x2 - mean) / std
    assert out2.shape == x2.shape
    assert jnp.allclose(out2, ref2, atol=1e-6, rtol=1e-6), "mismatch vs reference (ragged)"

    print("KERNEL_OK")
</pallas_src>

<mosaic_0001>
module attributes {stable_mosaic.version = 11 : i64} {
  func.func @kernel(%arg0: i32, %arg1: memref<8x128xf32, #tpu.memory_space<vmem>>, %arg2: memref<8x128xf32, #tpu.memory_space<vmem>>) attributes {dimension_semantics = [#tpu.dimension_semantics<parallel>], iteration_bounds = array<i64: 2>, scalar_prefetch = 0 : i64, scratch_operands = 0 : i64, tpu.core_type = #tpu.core_type<tc>, window_params = [{transform_indices = @transform_0, window_bounds = array<i64: 8, 128>}, {transform_indices = @transform_1, window_bounds = array<i64: 8, 128>}]} {
    %c0 = arith.constant 0 : index
    %c0_0 = arith.constant 0 : index
    %0 = vector.load %arg1[%c0, %c0_0] : memref<8x128xf32, #tpu.memory_space<vmem>>, vector<8x128xf32>
    %cst = arith.constant 1.500000e+00 : f32
    %1 = vector.broadcast %cst : f32 to vector<8x128xf32>
    %2 = arith.subf %0, %1 : vector<8x128xf32>
    %cst_1 = arith.constant 3.000000e+00 : f32
    %3 = vector.broadcast %cst_1 : f32 to vector<8x128xf32>
    %4 = arith.divf %2, %3 : vector<8x128xf32>
    %c0_2 = arith.constant 0 : index
    %c0_3 = arith.constant 0 : index
    %5 = vector.load %arg2[%c0_2, %c0_3] : memref<8x128xf32, #tpu.memory_space<vmem>>, vector<8x128xf32>
    tpu.vector_store %arg2[%c0_2, %c0_3], %4 {strides = array<i32>} : memref<8x128xf32, #tpu.memory_space<vmem>>, vector<8x128xf32>,
    return
  }
  func.func @transform_0(%arg0: i32) -> (i32, i32) {
    %c0_i32 = arith.constant 0 : i32
    %c0_i32_0 = arith.constant 0 : i32
    return %arg0, %c0_i32 : i32, i32
  }
  func.func @transform_1(%arg0: i32) -> (i32, i32) {
    %c0_i32 = arith.constant 0 : i32
    %c0_i32_0 = arith.constant 0 : i32
    return %arg0, %c0_i32 : i32, i32
  }
}

</mosaic_0001>

<llo_original>
// kernel: tpu_custom_call.1
$region0: #{tpu_custom_call.1}
  #allocation0 [shape = 'u32[]', space=smem, size = 0x4, offset = 0x4, fixed_abs, tag = 'smem constant byte address 0x4 - core index']
  #allocation1 [shape = 'u32[144,128]{1,0:T(1,128)}', space=vmem, size = 0x12000, scoped, tag = 'internal scratch']
  %s0 = inlined_call_operand.hbm [shape: f32[16,128], index: 0, kind: input, shape index: {}]
  %s1 = inlined_call_operand.hbm [shape: f32[16,128], index: 1, kind: output, shape index: {}]
  %s2 = sld [smem:[#allocation0]]
  $region41: #{tpu_custom_call.1} parent=0
    _
  %s4 = ssub.s32 1, %s2
  %s5 = scalar_select 0, %s4, %s2
  $region1: #{tpu_custom_call.1} parent=0
    #allocation2 [shape = 'u8[8192]{0}', space=vmem, size = 0x2000, scoped, tag = 'input window, operand 0']
    #allocation3 [shape = 's32[2]{0}', space=sflag, size = 0x8, scoped, tag = 'scoped memory for tpu_custom_call.1']
    #allocation4 [shape = 's32[2]{0}', space=sflag, size = 0x8, scoped, tag = 'scoped memory for tpu_custom_call.1']
    #allocation5 [shape = 'u8[8192]{0}', space=vmem, size = 0x2000, scoped, tag = 'output window, operand 0']
    %6 = vsyncpa [#allocation3], 0
    %s7 = scalar_lea.sflag [#allocation3], 1
    %8 = vsyncpa %s7, 0
    %9 = vsyncpa [#allocation4], 0
    %s10 = scalar_lea.sflag [#allocation4], 1
    %11 = vsyncpa %s10, 0
    loop: start=0, step=1, limit=4
    $region2: #{tpu_custom_call.1} parent=1 // loop_pre_header
      _
    $region3: #{tpu_custom_call.1} parent=1 // loop_header
      %s13 = sphi 0, %s17
      %p14 = scmp.ge.s32.totalorder %s13, 4
      %s23 = sphi 0, %s25
      %s26 = sphi 0, %s23
      %s27 = sphi 0, %s26
      %s43 = sphi 0, %s27
      %s49 = sphi 0, %s51
      %s52 = sphi 0, %s49
      %s53 = sphi 0, %s52
      %s69 = sphi 0, %s53
    $region4: #{tpu_custom_call.1} parent=1 // loop_header_branch
      %16 = sbr.rel (%p14) target = $region8
    $region5: #{tpu_custom_call.1} parent=1 // loop_body
      %s18 = ssub.s32 %s13, 1
      %s19 = ssub.s32 %s13, 2
      %s20 = sadd.s32 %s13, 1
      %s21 = ssub.s32 %s13, %s20
      %p22 = scmp.eq.s32.totalorder %s21, 0
      %s24 = sadd.s32 %s23, 1
      %s25 = scalar_select %p22, %s23, %s24
      %p28 = pneg %p22
      %p29 = scmp.eq.s32.totalorder %s13, 1
      %p30 = por %p28, %p29
      %p31 = scmp.ne.s32.totalorder %s23, %s26
      %p32 = scmp.eq.s32.totalorder %s13, 0
      %p33 = por %p31, %p32
      %p34 = scmp.ne.s32.totalorder %s23, %s26
      %p35 = scmp.eq.s32.totalorder %s18, 1
      %p36 = por %p34, %p35
      %p37 = scmp.ne.s32.totalorder %s26, %s27
      %p38 = scmp.eq.s32.totalorder %s18, 0
      %p39 = por %p37, %p38
      %p40 = scmp.ne.s32.totalorder %s26, %s27
      %p41 = scmp.eq.s32.totalorder %s19, 1
      %p42 = por %p40, %p41
      %p44 = scmp.ne.s32.totalorder %s27, %s43
      %p45 = scmp.eq.s32.totalorder %s19, 0
      %p46 = por %p44, %p45
      %s47 = ssub.s32 %s13, %s20
      %p48 = scmp.eq.s32.totalorder %s47, 0
      %s50 = sadd.s32 %s49, 1
      %s51 = scalar_select %p48, %s49, %s50
      %p54 = pneg %p48
      %p55 = scmp.eq.s32.totalorder %s13, 1
      %p56 = por %p54, %p55
      %p57 = scmp.ne.s32.totalorder %s49, %s52
      %p58 = scmp.eq.s32.totalorder %s13, 0
      %p59 = por %p57, %p58
      %p60 = scmp.ne.s32.totalorder %s49, %s52
      %p61 = scmp.eq.s32.totalorder %s18, 1
      %p62 = por %p60, %p61
      %p63 = scmp.ne.s32.totalorder %s52, %s53
      %p64 = scmp.eq.s32.totalorder %s18, 0
      %p65 = por %p63, %p64
      %p66 = scmp.ne.s32.totalorder %s52, %s53
      %p67 = scmp.eq.s32.totalorder %s19, 1
      %p68 = por %p66, %p67
      %p70 = scmp.ne.s32.totalorder %s53, %s69
      %p71 = scmp.eq.s32.totalorder %s19, 0
      %p72 = por %p70, %p71
      %p73 = scmp.le.s32.totalorder 1, %s13
      %p74 = scmp.lt.s32.totalorder %s13, 3
      %p75 = pnand %p73, %p74
      %p76 = pneg %p75
      // Predicated region
      $region9: #{tpu_custom_call.1} parent=5 // pred_check
        _
      $region10: #{tpu_custom_call.1} parent=5 // pred_check_branch
        %78 = sbr.rel (%p75) target = $region12
      $region11: #{tpu_custom_call.1} parent=5 // pred_region
        %s79 = ssub.s32 %s13, 1
      $region12: #{tpu_custom_call.1} parent=5 // pred_fallthru
        _
      %p80 = scmp.lt.s32.totalorder %s13, 2
      // Predicated region
      $region13: #{tpu_custom_call.1} parent=5 // pred_check
        %p81 = pneg %p80
      $region14: #{tpu_custom_call.1} parent=5 // pred_check_branch
        %83 = sbr.rel (%p81) target = $region16
      $region15: #{tpu_custom_call.1} parent=5 // pred_region
        // Predicated region
        $region17: #{tpu_custom_call.1} parent=15 // pred_check
          %p84 = pneg %p33
        $region18: #{tpu_custom_call.1} parent=15 // pred_check_branch
          %86 = sbr.rel (%p84) target = $region20
        $region19: #{tpu_custom_call.1} parent=15 // pred_region
          %s87 = sand.u32 %s23, 1
          %s88 = scalar_lea.sflag [#allocation3], %s87
          %s89 = sand.u32 %s23, 1
          %s90 = smul.addr %s89, 8
          %s91 = scalar_lea.vmem [#allocation2], %s90
          %s93 = ssub.s32 128, 128
          %94 = vsyncadd %s88, %s93
          %s95 = smul.addr %s13, 128
          %s96 = scalar_lea.hbm %s0, %s95
          %s98 = sshll.u32 %s91, 4
          %s99 = int_to_ptr.vmem [resolvable:$true] %s98
          %101 = dma.hbm_to_vmem [thread:$0]  %s96, 128, %s99, %s88
        $region20: #{tpu_custom_call.1} parent=15 // pred_fallthru
          _
      $region16: #{tpu_custom_call.1} parent=5 // pred_fallthru
        _
      %p102 = scmp.le.s32.totalorder 1, %s13
      %p103 = scmp.lt.s32.totalorder %s13, 3
      %p104 = pnand %p102, %p103
      %p105 = pneg %p104
      // Predicated region
      $region21: #{tpu_custom_call.1} parent=5 // pred_check
        _
      $region22: #{tpu_custom_call.1} parent=5 // pred_check_branch
        %107 = sbr.rel (%p104) target = $region24
      $region23: #{tpu_custom_call.1} parent=5 // pred_region
        %s108 = ssub.s32 %s13, 1
        %s109 = sand.u32 %s26, 1
        %s110 = scalar_lea.sflag [#allocation3], %s109
        %s111 = sand.u32 %s26, 1
        %s112 = smul.addr %s111, 8
        %s113 = scalar_lea.vmem [#allocation2], %s112
        // Predicated region
        $region25: #{tpu_custom_call.1} parent=23 // pred_check
          %p114 = pneg %p39
        $region26: #{tpu_custom_call.1} parent=23 // pred_check_branch
          %116 = sbr.rel (%p114) target = $region28
        $region27: #{tpu_custom_call.1} parent=23 // pred_region
          %117 = dma.done %s110, 128
        $region28: #{tpu_custom_call.1} parent=23 // pred_fallthru
          _
        %s118 = sand.u32 %s26, 1
        %s119 = scalar_lea.sflag [#allocation3], %s118
        %s120 = sand.u32 %s26, 1
        %s121 = smul.addr %s120, 8
        %s122 = scalar_lea.vmem [#allocation2], %s121
        %p123 = pneg %p39
        %p124 = pneg %p36
        %p125 = pneg %p65
        %p126 = pneg %p62
        %s127 = sand.u32 %s52, 1
        %s128 = scalar_lea.sflag [#allocation4], %s127
        %s129 = sand.u32 %s52, 1
        %s130 = smul.addr %s129, 8
        %s131 = scalar_lea.vmem [#allocation5], %s130
        %v132 = vld [vmem:[%s113] sm:$0xff]
        %v133 = vsub.f32 %v132, 1.5
        %v134 = vrcp.pop 3.0
        %v135 = vmul.f32 %v133, %v134
        %136 = vst [vmem:[%s131] sm:$0xff] %v135
        %s137 = sand.u32 %s52, 1
        %s138 = scalar_lea.sflag [#allocation4], %s137
        %s139 = sand.u32 %s52, 1
        %s140 = smul.addr %s139, 8
        %s141 = scalar_lea.vmem [#allocation5], %s140
        // Predicated region
        $region29: #{tpu_custom_call.1} parent=23 // pred_check
          %p142 = pneg %p62
        $region30: #{tpu_custom_call.1} parent=23 // pred_check_branch
          %144 = sbr.rel (%p142) target = $region32
        $region31: #{tpu_custom_call.1} parent=23 // pred_region
          %s146 = ssub.s32 128, 128
          %147 = vsyncadd %s138, %s146
          %s148 = smul.addr %s18, 128
          %s149 = scalar_lea.hbm %s1, %s148
          %s151 = sshll.u32 %s141, 4
          %s152 = int_to_ptr.vmem [resolvable:$true] %s151
          %154 = dma.vmem_to_hbm [thread:$0]  %s152, 128, %s149, %s138
        $region32: #{tpu_custom_call.1} parent=23 // pred_fallthru
          _
      $region24: #{tpu_custom_call.1} parent=5 // pred_fallthru
        _
      %p155 = scmp.le.s32.totalorder 2, %s13
      // Predicated region
      $region33: #{tpu_custom_call.1} parent=5 // pred_check
        %p156 = pneg %p155
      $region34: #{tpu_custom_call.1} parent=5 // pred_check_branch
        %158 = sbr.rel (%p156) target = $region36
      $region35: #{tpu_custom_call.1} parent=5 // pred_region
        %s159 = ssub.s32 %s13, 2
        // Predicated region
        $region37: #{tpu_custom_call.1} parent=35 // pred_check
          %p160 = pneg %p68
        $region38: #{tpu_custom_call.1} parent=35 // pred_check_branch
          %162 = sbr.rel (%p160) target = $region40
        $region39: #{tpu_custom_call.1} parent=35 // pred_region
          %s163 = sand.u32 %s53, 1
          %s164 = scalar_lea.sflag [#allocation4], %s163
          %s165 = sand.u32 %s53, 1
          %s166 = smul.addr %s165, 8
          %s167 = scalar_lea.vmem [#allocation5], %s166
          %168 = dma.done %s164, 128
        $region40: #{tpu_custom_call.1} parent=35 // pred_fallthru
          _
      $region36: #{tpu_custom_call.1} parent=5 // pred_fallthru
        _
    $region6: #{tpu_custom_call.1} parent=1 // loop_footer
      %s17 = sadd.s32 1, %s13
    $region7: #{tpu_custom_call.1} parent=1 // loop_footer_branch
      %12 = sbr.rel target = $region3
    $region8: #{tpu_custom_call.1} parent=1 // loop_exit
      _
    %169 = vsyncpa [#allocation3], 1
    %s170 = scalar_lea.sflag [#allocation3], 1
    %171 = vsyncpa %s170, 1
    %172 = vsyncpa [#allocation4], 1
    %s173 = scalar_lea.sflag [#allocation4], 1
    %174 = vsyncpa %s173, 1

</llo_original>
